<compile_context>
chip_gen: v5e
topology: v5e:2x2
jax: 0.10.0
libtpu: 0.0.40
codegen_flags: <defaults>
</compile_context>

<pallas_src>
import jax
import jax.numpy as jnp
from jax.experimental import pallas as pl
from jax.experimental.pallas import tpu as pltpu


def _round_up(x, m):
    return ((x + m - 1) // m) * m


def _highway_kernel(x_ref, wp_ref, bp_ref, wc_ref, bc_ref,
                    logits_ref, pooled_ref):
    """One batch tile of the IBertHighway head.

    x_ref      : (TB, H)   first-token activations (native dtype)
    wp_ref     : (H, H)    pooler weight, torch layout (out, in)
    bp_ref     : (1, H)    pooler bias
    wc_ref     : (Lp, H)   classifier weight, zero-padded to lane-dense Lp
    bc_ref     : (1, Lp)   classifier bias, zero-padded
    logits_ref : (TB, Lp)  padded logits tile
    pooled_ref : (TB, H)   pooled tile
    """
    x0 = x_ref[...]
    wp = wp_ref[...]

    # Pooler dense: contract the last (hidden) axis of both operands so the
    # (out, in) weight feeds the MXU with no cross-lane transpose; accumulate
    # in f32 on the MXU, keep bias-add + tanh in f32 (EUP handles tanh).
    acc = jax.lax.dot_general(
        x0, wp,
        dimension_numbers=(((1,), (1,)), ((), ())),
        preferred_element_type=jnp.float32)
    pooled = jnp.tanh(acc + bp_ref[...].astype(jnp.float32))
    pooled_ref[...] = pooled.astype(pooled_ref.dtype)

    # Classifier dense (output dim padded to a lane multiple -> dense vst).
    wc = wc_ref[...]
    logits = jax.lax.dot_general(
        pooled.astype(wc.dtype), wc,
        dimension_numbers=(((1,), (1,)), ((), ())),
        preferred_element_type=jnp.float32)
    logits = logits + bc_ref[...].astype(jnp.float32)
    logits_ref[...] = logits.astype(logits_ref.dtype)


def ibert_highway_forward(hidden_states, wp, bp, wc, bc):
    """IBertHighway forward.

    hidden_states: (B, S, H); wp: (H, H); bp: (H,); wc: (L, H); bc: (L,)
    Returns (logits (B, L), pooled_output (B, H)).
    """
    B, S, H = hidden_states.shape
    L = wc.shape[0]
    dtype = hidden_states.dtype
    itemsize = jnp.dtype(dtype).itemsize

    # Only token 0 is consumed -> slice BEFORE the kernel so only (B, H)
    # ever gets DMA'd into VMEM.
    x0 = hidden_states[:, 0, :]

    # Batch tiling: pad to a sublane multiple (8); tile large batches so the
    # two v7x TensorCores split them along a "parallel" grid axis.
    TB = 256 if B >= 256 else _round_up(B, 8)
    Bp = _round_up(B, TB)
    if Bp != B:
        x0 = jnp.pad(x0, ((0, Bp - B), (0, 0)))

    # Lane-dense classifier output: pad num_labels up to a multiple of 128.
    Lp = _round_up(L, 128)
    wc_p = jnp.pad(wc, ((0, Lp - L), (0, 0)))
    bc_p = jnp.pad(bc, ((0, Lp - L),)).reshape(1, Lp)
    bp2 = bp.reshape(1, H)

    grid = (Bp // TB,)

    in_specs = [
        pl.BlockSpec((TB, H), lambda i: (i, 0)),    # x0 batch tile
        pl.BlockSpec((H, H), lambda i: (0, 0)),     # pooler weight (constant block -> fetched once)
        pl.BlockSpec((1, H), lambda i: (0, 0)),     # pooler bias
        pl.BlockSpec((Lp, H), lambda i: (0, 0)),    # classifier weight (padded)
        pl.BlockSpec((1, Lp), lambda i: (0, 0)),    # classifier bias (padded)
    ]
    out_specs = (
        pl.BlockSpec((TB, Lp), lambda i: (i, 0)),   # logits tile
        pl.BlockSpec((TB, H), lambda i: (i, 0)),    # pooled tile
    )
    out_shapes = (
        jax.ShapeDtypeStruct((Bp, Lp), dtype),
        jax.ShapeDtypeStruct((Bp, H), dtype),
    )

    # Explicit VMEM budget: double-buffered tiles + resident weights + slack.
    tile_bytes = (TB * H + H * H + H + Lp * H + Lp + TB * Lp + TB * H) * itemsize
    vmem_limit = min(max(4 * tile_bytes + (4 << 20), 16 << 20), 32 << 20)

    cost = pl.CostEstimate(
        flops=2 * Bp * H * H + 2 * Bp * H * Lp,
        transcendentals=Bp * H,
        bytes_accessed=(Bp * H + H * H + H + Lp * H + Lp
                        + Bp * Lp + Bp * H) * itemsize,
    )

    logits_p, pooled_p = pl.pallas_call(
        _highway_kernel,
        out_shape=out_shapes,
        grid=grid,
        in_specs=in_specs,
        out_specs=out_specs,
        compiler_params=pltpu.CompilerParams(
            dimension_semantics=("parallel",),
            vmem_limit_bytes=vmem_limit,
        ),
        cost_estimate=cost,
    )(x0, wp, bp2, wc_p, bc_p)

    # Strip batch / label padding.
    return logits_p[:B, :L], pooled_p[:B]


if __name__ == "__main__":
    # Small config: batch=2, seq=8, hidden=32, num_labels=3
    B, S, H, L = 2, 8, 32, 3

    key = jax.random.PRNGKey(0)
    k_x, k_wp, k_bp, k_wc, k_bc = jax.random.split(key, 5)

    hidden_states = jax.random.normal(k_x, (B, S, H), dtype=jnp.float32)

    # Deterministic parameter init (shapes per nn.Linear in the module).
    wp = jax.random.normal(k_wp, (H, H), dtype=jnp.float32) * 0.02   # pooler.dense.weight
    bp = jax.random.normal(k_bp, (H,), dtype=jnp.float32) * 0.02     # pooler.dense.bias
    wc = jax.random.normal(k_wc, (L, H), dtype=jnp.float32) * 0.02   # classifier.weight
    bc = jax.random.normal(k_bc, (L,), dtype=jnp.float32) * 0.02     # classifier.bias

    logits, pooled = ibert_highway_forward(hidden_states, wp, bp, wc, bc)
    jax.block_until_ready((logits, pooled))

    # Reference check in plain JAX (same math as the PyTorch forward).
    x0 = hidden_states[:, 0, :]
    pooled_ref = jnp.tanh(x0 @ wp.T + bp)
    logits_ref = pooled_ref @ wc.T + bc
    assert logits.shape == (B, L) and pooled.shape == (B, H)
    assert jnp.allclose(pooled, pooled_ref, atol=1e-5, rtol=1e-5)
    assert jnp.allclose(logits, logits_ref, atol=1e-5, rtol=1e-5)

    print("KERNEL_OK")
</pallas_src>

<mosaic_0001>
module attributes {stable_mosaic.version = 11 : i64} {
  func.func @_highway_kernel(%arg0: i32, %arg1: memref<8x32xf32, #tpu.memory_space<vmem>>, %arg2: memref<32x32xf32, #tpu.memory_space<vmem>>, %arg3: memref<1x32xf32, #tpu.memory_space<vmem>>, %arg4: memref<128x32xf32, #tpu.memory_space<vmem>>, %arg5: memref<1x128xf32, #tpu.memory_space<vmem>>, %arg6: memref<8x128xf32, #tpu.memory_space<vmem>>, %arg7: memref<8x32xf32, #tpu.memory_space<vmem>>) attributes {dimension_semantics = [#tpu.dimension_semantics<parallel>], iteration_bounds = array<i64: 1>, scalar_prefetch = 0 : i64, scratch_operands = 0 : i64, tpu.core_type = #tpu.core_type<tc>, window_params = [{transform_indices = @transform_0, window_bounds = array<i64: 8, 32>}, {pipeline_mode = #tpu.pipeline_mode<synchronous>, transform_indices = @transform_1, window_bounds = array<i64: 32, 32>}, {pipeline_mode = #tpu.pipeline_mode<synchronous>, transform_indices = @transform_2, window_bounds = array<i64: 1, 32>}, {pipeline_mode = #tpu.pipeline_mode<synchronous>, transform_indices = @transform_3, window_bounds = array<i64: 128, 32>}, {pipeline_mode = #tpu.pipeline_mode<synchronous>, transform_indices = @transform_4, window_bounds = array<i64: 1, 128>}, {transform_indices = @transform_5, window_bounds = array<i64: 8, 128>}, {transform_indices = @transform_6, window_bounds = array<i64: 8, 32>}]} {
    %c0 = arith.constant 0 : index
    %c0_0 = arith.constant 0 : index
    %0 = vector.load %arg1[%c0, %c0_0] : memref<8x32xf32, #tpu.memory_space<vmem>>, vector<8x32xf32>
    %c0_1 = arith.constant 0 : index
    %c0_2 = arith.constant 0 : index
    %1 = vector.load %arg2[%c0_1, %c0_2] : memref<32x32xf32, #tpu.memory_space<vmem>>, vector<32x32xf32>
    %cst = arith.constant dense<0.000000e+00> : vector<8x32xf32>
    %2 = tpu.matmul %0, %1, %cst {dimension_numbers = #tpu.dot_dimension_numbers<[1], [1], [0], [0], [0, 0, 1, 0], [], []>} : vector<8x32xf32>, vector<32x32xf32>, vector<8x32xf32> -> vector<8x32xf32>
    %c0_3 = arith.constant 0 : index
    %c0_4 = arith.constant 0 : index
    %3 = vector.load %arg3[%c0_3, %c0_4] : memref<1x32xf32, #tpu.memory_space<vmem>>, vector<1x32xf32>
    %4 = vector.broadcast %3 : vector<1x32xf32> to vector<8x32xf32>
    %5 = arith.addf %2, %4 : vector<8x32xf32>
    %6 = math.tanh %5 : vector<8x32xf32>
    %c0_5 = arith.constant 0 : index
    %c0_6 = arith.constant 0 : index
    %7 = vector.load %arg7[%c0_5, %c0_6] : memref<8x32xf32, #tpu.memory_space<vmem>>, vector<8x32xf32>
    tpu.vector_store %arg7[%c0_5, %c0_6], %6 {strides = array<i32>} : memref<8x32xf32, #tpu.memory_space<vmem>>, vector<8x32xf32>,
    %c0_7 = arith.constant 0 : index
    %c0_8 = arith.constant 0 : index
    %8 = vector.load %arg4[%c0_7, %c0_8] : memref<128x32xf32, #tpu.memory_space<vmem>>, vector<128x32xf32>
    %cst_9 = arith.constant dense<0.000000e+00> : vector<8x128xf32>
    %9 = tpu.matmul %6, %8, %cst_9 {dimension_numbers = #tpu.dot_dimension_numbers<[1], [1], [0], [0], [0, 0, 1, 0], [], []>} : vector<8x32xf32>, vector<128x32xf32>, vector<8x128xf32> -> vector<8x128xf32>
    %c0_10 = arith.constant 0 : index
    %c0_11 = arith.constant 0 : index
    %10 = vector.load %arg5[%c0_10, %c0_11] : memref<1x128xf32, #tpu.memory_space<vmem>>, vector<1x128xf32>
    %11 = vector.broadcast %10 : vector<1x128xf32> to vector<8x128xf32>
    %12 = arith.addf %9, %11 : vector<8x128xf32>
    %c0_12 = arith.constant 0 : index
    %c0_13 = arith.constant 0 : index
    %13 = vector.load %arg6[%c0_12, %c0_13] : memref<8x128xf32, #tpu.memory_space<vmem>>, vector<8x128xf32>
    tpu.vector_store %arg6[%c0_12, %c0_13], %12 {strides = array<i32>} : memref<8x128xf32, #tpu.memory_space<vmem>>, vector<8x128xf32>,
    return
  }
  func.func @transform_0(%arg0: i32) -> (i32, i32) {
    %c0_i32 = arith.constant 0 : i32
    %c0_i32_0 = arith.constant 0 : i32
    return %arg0, %c0_i32 : i32, i32
  }
  func.func @transform_1(%arg0: i32) -> (i32, i32) {
    %c0_i32 = arith.constant 0 : i32
    %c0_i32_0 = arith.constant 0 : i32
    %c0_i32_1 = arith.constant 0 : i32
    return %c0_i32, %c0_i32_0 : i32, i32
  }
  func.func @transform_2(%arg0: i32) -> (i32, i32) {
    %c0_i32 = arith.constant 0 : i32
    %c0_i32_0 = arith.constant 0 : i32
    %c0_i32_1 = arith.constant 0 : i32
    return %c0_i32, %c0_i32_0 : i32, i32
  }
  func.func @transform_3(%arg0: i32) -> (i32, i32) {
    %c0_i32 = arith.constant 0 : i32
    %c0_i32_0 = arith.constant 0 : i32
    %c0_i32_1 = arith.constant 0 : i32
    return %c0_i32, %c0_i32_0 : i32, i32
  }
  func.func @transform_4(%arg0: i32) -> (i32, i32) {
    %c0_i32 = arith.constant 0 : i32
    %c0_i32_0 = arith.constant 0 : i32
    %c0_i32_1 = arith.constant 0 : i32
    return %c0_i32, %c0_i32_0 : i32, i32
  }
  func.func @transform_5(%arg0: i32) -> (i32, i32) {
    %c0_i32 = arith.constant 0 : i32
    %c0_i32_0 = arith.constant 0 : i32
    return %arg0, %c0_i32 : i32, i32
  }
  func.func @transform_6(%arg0: i32) -> (i32, i32) {
    %c0_i32 = arith.constant 0 : i32
    %c0_i32_0 = arith.constant 0 : i32
    return %arg0, %c0_i32 : i32, i32
  }
}

</mosaic_0001>

<llo_original>
// kernel: tpu_custom_call.1
$region0: #{tpu_custom_call.1}
  #allocation0 [shape = 'u32[]', space=smem, size = 0x4, offset = 0x4, fixed_abs, tag = 'smem constant byte address 0x4 - core index']
  #allocation1 [shape = 'u32[72,128]{1,0:T(1,128)}', space=vmem, size = 0x9000, scoped, tag = 'internal scratch']
  %s0 = inlined_call_operand.vmem [shape: f32[8,32], index: 0, kind: input, shape index: {}]
  %s1 = inlined_call_operand.vmem [shape: f32[32,32], index: 1, kind: input, shape index: {}]
  %s2 = inlined_call_operand.vmem [shape: f32[1,32], index: 2, kind: input, shape index: {}]
  %s3 = inlined_call_operand.vmem [shape: f32[128,32], index: 3, kind: input, shape index: {}]
  %s4 = inlined_call_operand.vmem [shape: f32[1,128], index: 4, kind: input, shape index: {}]
  %s5 = inlined_call_operand.hbm [shape: f32[8,128], index: 5, kind: output, shape index: {0}]
  %s6 = inlined_call_operand.hbm [shape: f32[8,32], index: 6, kind: output, shape index: {1}]
  %7 = xla_tuple %s5, %s6
  %s8 = sld [smem:[#allocation0]]
  $region38: #{tpu_custom_call.1} parent=0
    _
  %s10 = ssub.s32 1, %s8
  %s11 = scalar_select 0, %s10, %s8
  $region1: #{tpu_custom_call.1} parent=0
    #allocation2 [shape = 'u8[4096]{0}', space=vmem, size = 0x1000, scoped, tag = 'output window, operand 0, single buffered']
    #allocation3 [shape = 's32[1]{0}', space=sflag, size = 0x4, scoped, tag = 'scoped memory for tpu_custom_call.1']
    #allocation4 [shape = 'u8[4096]{0}', space=vmem, size = 0x1000, scoped, tag = 'output window, operand 1, single buffered']
    #allocation5 [shape = 's32[1]{0}', space=sflag, size = 0x4, scoped, tag = 'scoped memory for tpu_custom_call.1']
    %12 = vsyncpa [#allocation3], 0
    %13 = vsyncpa [#allocation5], 0
    // Predicated region
    $region2: #{tpu_custom_call.1} parent=1 // pred_check
      _
    $region3: #{tpu_custom_call.1} parent=1 // pred_check_branch
      %15 = sbr.rel (0) target = $region5
    $region4: #{tpu_custom_call.1} parent=1 // pred_region
      _
    $region5: #{tpu_custom_call.1} parent=1 // pred_fallthru
      _
    // Predicated region
    $region6: #{tpu_custom_call.1} parent=1 // pred_check
      _
    $region7: #{tpu_custom_call.1} parent=1 // pred_check_branch
      %17 = sbr.rel (0) target = $region9
    $region8: #{tpu_custom_call.1} parent=1 // pred_region
      _
    $region9: #{tpu_custom_call.1} parent=1 // pred_fallthru
      _
    // Predicated region
    $region10: #{tpu_custom_call.1} parent=1 // pred_check
      _
    $region11: #{tpu_custom_call.1} parent=1 // pred_check_branch
      %19 = sbr.rel (0) target = $region13
    $region12: #{tpu_custom_call.1} parent=1 // pred_region
      _
    $region13: #{tpu_custom_call.1} parent=1 // pred_fallthru
      _
    // Predicated region
    $region14: #{tpu_custom_call.1} parent=1 // pred_check
      _
    $region15: #{tpu_custom_call.1} parent=1 // pred_check_branch
      %21 = sbr.rel (0) target = $region17
    $region16: #{tpu_custom_call.1} parent=1 // pred_region
      _
    $region17: #{tpu_custom_call.1} parent=1 // pred_fallthru
      _
    // Predicated region
    $region18: #{tpu_custom_call.1} parent=1 // pred_check
      _
    $region19: #{tpu_custom_call.1} parent=1 // pred_check_branch
      %23 = sbr.rel (0) target = $region21
    $region20: #{tpu_custom_call.1} parent=1 // pred_region
      _
    $region21: #{tpu_custom_call.1} parent=1 // pred_fallthru
      _
    %v24 = vld [vmem:[%s0] sm:$0xff]
    %v25 = vld [vmem:[%s1] sm:$0xff]
    %v26 = vld [vmem:[%s1 + $0x8] sm:$0xff]
    %v27 = vld [vmem:[%s1 + $0x10] sm:$0xff]
    %v28 = vld [vmem:[%s1 + $0x18] sm:$0xff]
    %v29 = vld [vmem:[%s2] sm:$0x1]
    %v31 = vperm.slane %v29, 0
    %vm33 = vcmask 261120
    %v35 = vsel %vm33, %v24, 0
    %v38 = vsel %vm33, %v25, 0
    %v41 = vsel %vm33, %v26, 0
    %v44 = vsel %vm33, %v27, 0
    %v47 = vsel %vm33, %v28, 0
    %49 = vmatpush.xpose.msra.mxu0 0.0
    %50 = vmatpush.xpose.msra.mxu0 0.0
    %51 = vmatpush.xpose.msra.mxu0 0.0
    %52 = vmatpush.xpose.msra.mxu0 0.0
    %53 = vmatpush.xpose.msra.mxu0 0.0
    %54 = vmatpush.xpose.msra.mxu0 0.0
    %55 = vmatpush.xpose.msra.mxu0 0.0
    %56 = vmatpush.xpose.msra.mxu0 0.0
    %57 = vmatpush.xpose.msra.mxu0 0.0
    %58 = vmatpush.xpose.msra.mxu0 0.0
    %59 = vmatpush.xpose.msra.mxu0 0.0
    %60 = vmatpush.xpose.msra.mxu0 0.0
    %61 = vmatpush.xpose.msra.mxu0 %v47
    %62 = vmatpush.xpose.msra.mxu0 %v44
    %63 = vmatpush.xpose.msra.mxu0 %v41
    %64 = vmatpush.xpose.msra.mxu0 %v38
    %65 = vmatmul.f32.gmra.mxu0 %v35
    %v66 = vpop.f32.mrf.mxu0
    %v67 = vadd.f32 %v31, %v66
    %68 = vdwg.mxu0
    %v69 = vtanh.pop %v67
    %70 = vst.msk [vmem:[#allocation4] sm:$0xff] %vm33, %v69
    %v71 = vld [vmem:[%s3] sm:$0xff]
    %v72 = vld [vmem:[%s3 + $0x8] sm:$0xff]
    %v73 = vld [vmem:[%s3 + $0x10] sm:$0xff]
    %v74 = vld [vmem:[%s3 + $0x18] sm:$0xff]
    %v75 = vld [vmem:[%s3 + $0x20] sm:$0xff]
    %v76 = vld [vmem:[%s3 + $0x28] sm:$0xff]
    %v77 = vld [vmem:[%s3 + $0x30] sm:$0xff]
    %v78 = vld [vmem:[%s3 + $0x38] sm:$0xff]
    %v79 = vld [vmem:[%s3 + $0x40] sm:$0xff]
    %v80 = vld [vmem:[%s3 + $0x48] sm:$0xff]
    %v81 = vld [vmem:[%s3 + $0x50] sm:$0xff]
    %v82 = vld [vmem:[%s3 + $0x58] sm:$0xff]
    %v83 = vld [vmem:[%s3 + $0x60] sm:$0xff]
    %v84 = vld [vmem:[%s3 + $0x68] sm:$0xff]
    %v85 = vld [vmem:[%s3 + $0x70] sm:$0xff]
    %v86 = vld [vmem:[%s3 + $0x78] sm:$0xff]
    %v87 = vld [vmem:[%s4] sm:$0x1]
    %v89 = vperm.slane %v87, 0
    %v92 = vsel %vm33, %v69, 0
    %v95 = vsel %vm33, %v71, 0
    %v98 = vsel %vm33, %v72, 0
    %v101 = vsel %vm33, %v73, 0
    %v104 = vsel %vm33, %v74, 0
    %v107 = vsel %vm33, %v75, 0
    %v110 = vsel %vm33, %v76, 0
    %v113 = vsel %vm33, %v77, 0
    %v116 = vsel %vm33, %v78, 0
    %v119 = vsel %vm33, %v79, 0
    %v122 = vsel %vm33, %v80, 0
    %v125 = vsel %vm33, %v81, 0
    %v128 = vsel %vm33, %v82, 0
    %v131 = vsel %vm33, %v83, 0
    %v134 = vsel %vm33, %v84, 0
    %v137 = vsel %vm33, %v85, 0
    %v140 = vsel %vm33, %v86, 0
    %142 = vmatpush.xpose.msra.mxu0 %v140
    %143 = vmatpush.xpose.msra.mxu0 %v137
    %144 = vmatpush.xpose.msra.mxu0 %v134
    %145 = vmatpush.xpose.msra.mxu0 %v131
    %146 = vmatpush.xpose.msra.mxu0 %v128
    %147 = vmatpush.xpose.msra.mxu0 %v125
    %148 = vmatpush.xpose.msra.mxu0 %v122
    %149 = vmatpush.xpose.msra.mxu0 %v119
    %150 = vmatpush.xpose.msra.mxu0 %v116
    %151 = vmatpush.xpose.msra.mxu0 %v113
    %152 = vmatpush.xpose.msra.mxu0 %v110
    %153 = vmatpush.xpose.msra.mxu0 %v107
    %154 = vmatpush.xpose.msra.mxu0 %v104
    %155 = vmatpush.xpose.msra.mxu0 %v101
    %156 = vmatpush.xpose.msra.mxu0 %v98
    %157 = vmatpush.xpose.msra.mxu0 %v95
    %158 = vmatmul.f32.gmra.mxu0 %v92
    %v159 = vpop.f32.mrf.mxu0
    %v160 = vadd.f32 %v89, %v159
    %161 = vdwg.mxu0
    %162 = vst [vmem:[#allocation2] sm:$0xff] %v160
    // Predicated region
    $region22: #{tpu_custom_call.1} parent=1 // pred_check
      _
    $region23: #{tpu_custom_call.1} parent=1 // pred_check_branch
      %164 = sbr.rel (0) target = $region25
    $region24: #{tpu_custom_call.1} parent=1 // pred_region
      %166 = vsyncadd [#allocation3], 0
      %s168 = sshll.u32 [#allocation2], 4
      %s169 = int_to_ptr.vmem [resolvable:$true] %s168
      %s170 = sshll.u32 %s5, 4
      %s171 = int_to_ptr.hbm [resolvable:$true] %s170
      %173 = dma.vmem_to_hbm [thread:$0]  %s169, 128, %s171, [#allocation3]
    $region25: #{tpu_custom_call.1} parent=1 // pred_fallthru
      _
    // Predicated region
    $region26: #{tpu_custom_call.1} parent=1 // pred_check
      _
    $region27: #{tpu_custom_call.1} parent=1 // pred_check_branch
      %175 = sbr.rel (0) target = $region29
    $region28: #{tpu_custom_call.1} parent=1 // pred_region
      %177 = vsyncadd [#allocation5], 0
      %s179 = sshll.u32 [#allocation4], 4
      %s180 = int_to_ptr.vmem [resolvable:$true] %s179
      %s181 = sshll.u32 %s6, 4
      %s182 = int_to_ptr.hbm [resolvable:$true] %s181
      %184 = dma.vmem_to_hbm [thread:$0]  %s180, 128, %s182, [#allocation5]
    $region29: #{tpu_custom_call.1} parent=1 // pred_fallthru
      _
    // Predicated region
    $region30: #{tpu_custom_call.1} parent=1 // pred_check
      _
    $region31: #{tpu_custom_call.1} parent=1 // pred_check_branch
      %186 = sbr.rel (0) target = $region33
    $region32: #{tpu_custom_call.1} parent=1 // pred_region
      %188 = dma.done [#allocation3], 128
    $region33: #{tpu_custom_call.1} parent=1 // pred_fallthru
      _
    // Predicated region
    $region34: #{tpu_custom_call.1} parent=1 // pred_check
      _
    $region35: #{tpu_custom_call.1} parent=1 // pred_check_branch
      %190 = sbr.rel (0) target = $region37
    $region36: #{tpu_custom_call.1} parent=1 // pred_region
      %192 = dma.done [#allocation5], 128
    $region37: #{tpu_custom_call.1} parent=1 // pred_fallthru
      _
    %193 = vsyncpa [#allocation3], 1
    %194 = vsyncpa [#allocation5], 1

</llo_original>
